<compile_context>
chip_gen: v7x
topology: tpu7x:2x2x1
jax: 0.10.0
libtpu: 0.0.40
codegen_flags: <defaults>
</compile_context>

<pallas_src>
import functools

import jax
import jax.numpy as jnp
from jax.experimental import pallas as pl
from jax.experimental.pallas import tpu as pltpu

_MIB = 1024 * 1024


def _round_up(n, m):
    return ((n + m - 1) // m) * m


# ---------------------------------------------------------------------------
# Kernel A: standard layout (bt, C, Lp) blocks.  Used when L % 128 == 0, or
# (with L zero-padded to a multiple of 128 in the wrapper) when C*L is too big
# for the flat path's constants.  Pooling runs on the VPU/XLU over the last
# axis; the two tiny FCs run on the otherwise-idle MXU.
# ---------------------------------------------------------------------------
def _se_kernel_std(x_ref, w1t_ref, w2t_ref, o_ref, *, inv_l):
    x = x_ref[...]                                               # (bt, C, Lp), x dtype
    # AdaptiveAvgPool1d(1): f32 sum over L (zero padding adds nothing), * 1/true_L.
    pooled = jnp.sum(x, axis=-1, dtype=jnp.float32) * inv_l      # (bt, C)
    # fc: Linear(C->C/r) -> ReLU -> Linear(C/r->C) -> Sigmoid (all bias-free).
    h = jnp.maximum(
        jnp.dot(pooled, w1t_ref[...], preferred_element_type=jnp.float32), 0.0)
    s = jax.nn.sigmoid(
        jnp.dot(h, w2t_ref[...], preferred_element_type=jnp.float32))        # (bt, C)
    # x * y.expand_as(x), multiply in the input dtype.
    o_ref[...] = x * s.astype(x.dtype)[:, :, None]


# ---------------------------------------------------------------------------
# Kernel B: flat lane-dense layout (bt, CLp) blocks, CLp = round_up(C*L, 128).
# Pooling + FC1 are one matmul against p1 = gather(W1^T)/L (exact f32 constant
# built in the wrapper); the channel->length broadcast is a matmul against a
# 0/1 expand matrix emitted directly in the output dtype.  No in-kernel
# relayout/reshape and no masked stores.
# ---------------------------------------------------------------------------
def _se_kernel_flat(x_ref, p1_ref, w2t_ref, expand_ref, o_ref):
    x = x_ref[...]                                               # (bt, CLp), x dtype
    h = jnp.maximum(
        jnp.dot(x, p1_ref[...], preferred_element_type=jnp.float32), 0.0)    # (bt, hid)
    s = jax.nn.sigmoid(
        jnp.dot(h, w2t_ref[...], preferred_element_type=jnp.float32))        # (bt, C)
    s_flat = jnp.dot(s.astype(x.dtype), expand_ref[...],
                     preferred_element_type=x.dtype)             # (bt, CLp), x dtype
    o_ref[...] = x * s_flat


def _vmem_config():
    """Generation-aware (x-tile byte budget, vmem_limit_bytes).

    v5e/v6e: 128 MiB VMEM per TensorCore -> big double-buffered tiles (8-16 MiB
    per x tile reaches ~85% of HBM roofline).  v7x: 64 MiB per TC -> smaller
    budget with explicit headroom for constants + compiler-internal scratch.
    """
    cap = 64 * _MIB
    try:
        cap = int(pltpu.get_tpu_info().vmem_capacity_bytes)
    except Exception:
        pass
    kind = ""
    try:
        kind = jax.devices()[0].device_kind.lower()
    except Exception:
        pass
    small_vmem = cap < 100 * _MIB or "v7" in kind or "7x" in kind
    if small_vmem:                       # v7x (or unknown): 64 MiB/TC physical
        return 28 * _MIB, 52 * _MIB
    return 64 * _MIB, 104 * _MIB         # v5e / v6e: 128 MiB/TC physical


def _choose_bt(B, row_elems, itemsize, budget_bytes, sublane, extra_bytes_per_row=0):
    """Batch rows per grid step.

    Byte-budgeted (no fixed row cap), rounded to the dtype sublane multiple,
    and capped so the grid keeps >=4 steps (2 per v7x TC) while each x tile
    stays >= 4 MiB (>=2 steps at >= 2 MiB) so DMA always overlaps compute.
    """
    if B <= sublane:
        return B
    row_bytes = row_elems * itemsize                    # one row of the x tile
    per_row = 4 * row_bytes + extra_bytes_per_row       # in+out, double-buffered
    cap_budget = max(sublane, budget_bytes // max(per_row, 1))
    cap_grid = B
    for steps, min_tile in ((4, 4 * _MIB), (2, 2 * _MIB)):
        c = (pl.cdiv(B, steps) // sublane) * sublane
        if c >= sublane and c * row_bytes >= min_tile:
            cap_grid = c
            break
    bt = min(B, cap_budget, cap_grid)
    return max(sublane, (bt // sublane) * sublane)


@jax.jit
def se_layer(x, w1, w2):
    """SELayer forward.  x: (B, C, L); w1: (C//r, C); w2: (C, C//r) (PyTorch Linear)."""
    B, C, L = x.shape
    hidden = w1.shape[0]
    assert w1.shape == (hidden, C) and w2.shape == (C, hidden)

    # Loop-invariant weight prep hoisted out of the kernel.
    w1t = w1.T.astype(jnp.float32)                 # (C, hidden)
    w2t = w2.T.astype(jnp.float32)                 # (hidden, C)
    inv_l = 1.0 / float(L)
    itemsize = jnp.dtype(x.dtype).itemsize
    sublane = max(8, 32 // itemsize)               # 8 (f32) / 16 (bf16) / 32 (int8)

    budget, vmem_limit = _vmem_config()
    cparams = pltpu.CompilerParams(
        dimension_semantics=("parallel",),         # shard batch grid across TCs (v7x)
        vmem_limit_bytes=vmem_limit,
    )

    lane_dense = (L % 128 == 0)
    CL = C * L
    CLp = _round_up(CL, 128)
    # Flat-path constants are double-buffered by Pallas: p1 (CLp, hidden) f32 and
    # expand (C, CLp) in x dtype.  Only take the flat path while they stay small
    # so they never squeeze the x tiles.
    flat_const_bytes = 2 * (CLp * hidden * 4 + C * CLp * itemsize)
    use_flat = (not lane_dense) and flat_const_bytes <= 4 * _MIB

    if not use_flat:
        # ------------- standard (bt, C, Lp) path, lane-dense stores -------------
        Lp = L if lane_dense else _round_up(L, 128)
        x_in = x if Lp == L else jnp.pad(x, ((0, 0), (0, 0), (0, Lp - L)))
        bt = _choose_bt(B, C * Lp, itemsize, budget, sublane,
                        extra_bytes_per_row=(C * Lp * 4 if itemsize < 4 else 0))
        cost = pl.CostEstimate(
            flops=int(2 * B * C * Lp + 4 * B * C * hidden + B * C * Lp),
            transcendentals=int(B * C),
            bytes_accessed=int(2 * B * C * Lp * itemsize + 8 * C * hidden),
        )
        out = pl.pallas_call(
            functools.partial(_se_kernel_std, inv_l=inv_l),
            out_shape=jax.ShapeDtypeStruct((B, C, Lp), x.dtype),
            grid_spec=pltpu.PrefetchScalarGridSpec(
                num_scalar_prefetch=0,
                grid=(pl.cdiv(B, bt),),
                in_specs=[
                    pl.BlockSpec((bt, C, Lp), lambda b: (b, 0, 0)),
                    pl.BlockSpec((C, hidden), lambda b: (0, 0)),
                    pl.BlockSpec((hidden, C), lambda b: (0, 0)),
                ],
                out_specs=pl.BlockSpec((bt, C, Lp), lambda b: (b, 0, 0)),
            ),
            compiler_params=cparams,
            cost_estimate=cost,
        )(x_in, w1t, w2t)
        return out if Lp == L else out[:, :, :L]

    # ------------- flat lane-dense (bt, CLp) path -------------
    pad = CLp - CL
    ch = jnp.repeat(jnp.arange(C, dtype=jnp.int32), L)                      # (CL,)
    if pad:
        ch = jnp.concatenate([ch, jnp.full((pad,), -1, dtype=jnp.int32)])   # (CLp,)
    valid = (ch >= 0)[:, None]
    # Pool folded into FC1: p1[i] = W1^T[channel(i)] / L; zero on pad rows (exact f32).
    p1 = jnp.where(valid, jnp.take(w1t, jnp.clip(ch, 0, C - 1), axis=0) * inv_l, 0.0)
    # 0/1 expand matrix in the input/output dtype (exact); pad columns are zero.
    expand = (ch[None, :] == jnp.arange(C, dtype=jnp.int32)[:, None]).astype(x.dtype)

    x_flat = x.reshape(B, CL)
    if pad:
        x_flat = jnp.pad(x_flat, ((0, 0), (0, pad)))

    bt = _choose_bt(B, CLp, itemsize, budget, sublane,
                    extra_bytes_per_row=CLp * itemsize)   # s_flat intermediate
    cost = pl.CostEstimate(
        flops=int(2 * B * CLp * hidden + 2 * B * hidden * C + 2 * B * C * CLp + B * CLp),
        transcendentals=int(B * C),
        bytes_accessed=int(2 * B * CLp * itemsize + 4 * CLp * hidden
                           + itemsize * C * CLp + 4 * hidden * C),
    )
    out_flat = pl.pallas_call(
        _se_kernel_flat,
        out_shape=jax.ShapeDtypeStruct((B, CLp), x.dtype),
        grid_spec=pltpu.PrefetchScalarGridSpec(
            num_scalar_prefetch=0,
            grid=(pl.cdiv(B, bt),),
            in_specs=[
                pl.BlockSpec((bt, CLp), lambda b: (b, 0)),
                pl.BlockSpec((CLp, hidden), lambda b: (0, 0)),
                pl.BlockSpec((hidden, C), lambda b: (0, 0)),
                pl.BlockSpec((C, CLp), lambda b: (0, 0)),
            ],
            out_specs=pl.BlockSpec((bt, CLp), lambda b: (b, 0)),
        ),
        compiler_params=cparams,
        cost_estimate=cost,
    )(x_flat, p1, w2t, expand)
    out_flat = out_flat[:, :CL] if pad else out_flat
    return out_flat.reshape(B, C, L)


def se_layer_ref(x, w1, w2):
    # Pure-JAX reference mirroring the PyTorch forward.
    pooled = jnp.mean(x.astype(jnp.float32), axis=-1)            # (B, C)
    h = jnp.maximum(pooled @ w1.astype(jnp.float32).T, 0.0)      # (B, C//r)
    s = jax.nn.sigmoid(h @ w2.astype(jnp.float32).T)             # (B, C)
    return (x.astype(jnp.float32) * s[:, :, None]).astype(x.dtype)


if __name__ == "__main__":
    reduction = 8
    keys = jax.random.split(jax.random.PRNGKey(0), 9)

    def mk(kx, kw1, kw2, B, C, L):
        hidden = C // reduction
        x = jax.random.normal(kx, (B, C, L), dtype=jnp.float32)
        w1 = jax.random.normal(kw1, (hidden, C), dtype=jnp.float32) * (1.0 / C ** 0.5)
        w2 = jax.random.normal(kw2, (C, hidden), dtype=jnp.float32) * (1.0 / hidden ** 0.5)
        return x, w1, w2

    # Tolerances allow for default MXU matmul precision differences across
    # TPU generations (the tiny FC / pool / expand matmuls run at default precision).
    tol = dict(atol=5e-3, rtol=5e-3)

    # Case 1: small L (16), L % 128 != 0 -> flat lane-dense path.
    x, w1, w2 = mk(keys[0], keys[1], keys[2], B=2, C=32, L=16)
    out = jax.block_until_ready(se_layer(x, w1, w2))
    assert jnp.allclose(out, se_layer_ref(x, w1, w2), **tol), "flat-path mismatch"

    # Case 2: L = 128 (already lane-dense) -> standard path, no padding.
    x, w1, w2 = mk(keys[3], keys[4], keys[5], B=4, C=32, L=128)
    out = jax.block_until_ready(se_layer(x, w1, w2))
    assert jnp.allclose(out, se_layer_ref(x, w1, w2), **tol), "std-path mismatch"

    # Case 3: L % 128 != 0 and C*L too big for the flat constants
    # -> standard path with L zero-padded to 256, output sliced back to 200.
    x, w1, w2 = mk(keys[6], keys[7], keys[8], B=2, C=64, L=200)
    out = jax.block_until_ready(se_layer(x, w1, w2))
    assert jnp.allclose(out, se_layer_ref(x, w1, w2), **tol), "padded-std-path mismatch"

    print("KERNEL_OK")
</pallas_src>

<mosaic_0001>
module attributes {stable_mosaic.version = 11 : i64} {
  func.func @_se_kernel_flat(%arg0: i32, %arg1: memref<2x512xf32, #tpu.memory_space<vmem>>, %arg2: memref<512x4xf32, #tpu.memory_space<vmem>>, %arg3: memref<4x32xf32, #tpu.memory_space<vmem>>, %arg4: memref<32x512xf32, #tpu.memory_space<vmem>>, %arg5: memref<2x512xf32, #tpu.memory_space<vmem>>) attributes {dimension_semantics = [#tpu.dimension_semantics<parallel>], iteration_bounds = array<i64: 1>, scalar_prefetch = 0 : i64, scratch_operands = 0 : i64, tpu.core_type = #tpu.core_type<tc>, window_params = [{transform_indices = @transform_0, window_bounds = array<i64: 2, 512>}, {pipeline_mode = #tpu.pipeline_mode<synchronous>, transform_indices = @transform_1, window_bounds = array<i64: 512, 4>}, {pipeline_mode = #tpu.pipeline_mode<synchronous>, transform_indices = @transform_2, window_bounds = array<i64: 4, 32>}, {pipeline_mode = #tpu.pipeline_mode<synchronous>, transform_indices = @transform_3, window_bounds = array<i64: 32, 512>}, {transform_indices = @transform_4, window_bounds = array<i64: 2, 512>}]} {
    %c0 = arith.constant 0 : index
    %c0_0 = arith.constant 0 : index
    %0 = vector.load %arg1[%c0, %c0_0] : memref<2x512xf32, #tpu.memory_space<vmem>>, vector<2x512xf32>
    %c0_1 = arith.constant 0 : index
    %c0_2 = arith.constant 0 : index
    %1 = vector.load %arg2[%c0_1, %c0_2] : memref<512x4xf32, #tpu.memory_space<vmem>>, vector<512x4xf32>
    %cst = arith.constant dense<0.000000e+00> : vector<2x4xf32>
    %2 = tpu.matmul %0, %1, %cst {dimension_numbers = #tpu.dot_dimension_numbers<[1], [0], [0], [1], [0, 0, 1, 1], [], []>} : vector<2x512xf32>, vector<512x4xf32>, vector<2x4xf32> -> vector<2x4xf32>
    %cst_3 = arith.constant 0.000000e+00 : f32
    %3 = vector.broadcast %cst_3 : f32 to vector<2x4xf32>
    %4 = arith.maximumf %2, %3 : vector<2x4xf32>
    %c0_4 = arith.constant 0 : index
    %c0_5 = arith.constant 0 : index
    %5 = vector.load %arg3[%c0_4, %c0_5] : memref<4x32xf32, #tpu.memory_space<vmem>>, vector<4x32xf32>
    %cst_6 = arith.constant dense<0.000000e+00> : vector<2x32xf32>
    %6 = tpu.matmul %4, %5, %cst_6 {dimension_numbers = #tpu.dot_dimension_numbers<[1], [0], [0], [1], [0, 0, 1, 1], [], []>} : vector<2x4xf32>, vector<4x32xf32>, vector<2x32xf32> -> vector<2x32xf32>
    %7 = arith.negf %6 : vector<2x32xf32>
    %8 = math.exp %7 : vector<2x32xf32>
    %cst_7 = arith.constant 1.000000e+00 : f32
    %9 = vector.broadcast %cst_7 : f32 to vector<2x32xf32>
    %10 = arith.addf %9, %8 : vector<2x32xf32>
    %11 = arith.divf %9, %10 : vector<2x32xf32>
    %c0_8 = arith.constant 0 : index
    %c0_9 = arith.constant 0 : index
    %12 = vector.load %arg4[%c0_8, %c0_9] : memref<32x512xf32, #tpu.memory_space<vmem>>, vector<32x512xf32>
    %cst_10 = arith.constant dense<0.000000e+00> : vector<2x512xf32>
    %13 = tpu.matmul %11, %12, %cst_10 {dimension_numbers = #tpu.dot_dimension_numbers<[1], [0], [0], [1], [0, 0, 1, 1], [], []>} : vector<2x32xf32>, vector<32x512xf32>, vector<2x512xf32> -> vector<2x512xf32>
    %14 = arith.mulf %0, %13 : vector<2x512xf32>
    %c0_11 = arith.constant 0 : index
    %c0_12 = arith.constant 0 : index
    %15 = vector.load %arg5[%c0_11, %c0_12] : memref<2x512xf32, #tpu.memory_space<vmem>>, vector<2x512xf32>
    tpu.vector_store %arg5[%c0_11, %c0_12], %14 {strides = array<i32>} : memref<2x512xf32, #tpu.memory_space<vmem>>, vector<2x512xf32>,
    return
  }
  func.func @transform_0(%arg0: i32) -> (i32, i32) {
    %c0_i32 = arith.constant 0 : i32
    %c0_i32_0 = arith.constant 0 : i32
    return %arg0, %c0_i32 : i32, i32
  }
  func.func @transform_1(%arg0: i32) -> (i32, i32) {
    %c0_i32 = arith.constant 0 : i32
    %c0_i32_0 = arith.constant 0 : i32
    %c0_i32_1 = arith.constant 0 : i32
    return %c0_i32, %c0_i32_0 : i32, i32
  }
  func.func @transform_2(%arg0: i32) -> (i32, i32) {
    %c0_i32 = arith.constant 0 : i32
    %c0_i32_0 = arith.constant 0 : i32
    %c0_i32_1 = arith.constant 0 : i32
    return %c0_i32, %c0_i32_0 : i32, i32
  }
  func.func @transform_3(%arg0: i32) -> (i32, i32) {
    %c0_i32 = arith.constant 0 : i32
    %c0_i32_0 = arith.constant 0 : i32
    %c0_i32_1 = arith.constant 0 : i32
    return %c0_i32, %c0_i32_0 : i32, i32
  }
  func.func @transform_4(%arg0: i32) -> (i32, i32) {
    %c0_i32 = arith.constant 0 : i32
    %c0_i32_0 = arith.constant 0 : i32
    return %arg0, %c0_i32 : i32, i32
  }
}

</mosaic_0001>

<llo_original>
// kernel: se_layer.1
$region0: #{se_layer.1}
  #allocation0 [shape = 'u32[]', space=smem, size = 0x4, offset = 0x4, fixed_abs, tag = 'smem constant byte address 0x4 - core index']
  #allocation1 [shape = 'u32[144,128]{1,0:T(1,128)}', space=vmem, size = 0x12000, scoped, tag = 'internal scratch']
  %s0 = inlined_call_operand.vmem [shape: f32[2,512], index: 0, kind: input, shape index: {}]
  %s1 = inlined_call_operand.vmem [shape: f32[512,4], index: 1, kind: input, shape index: {}]
  %s2 = inlined_call_operand.vmem [shape: f32[4,32], index: 2, kind: input, shape index: {}]
  %s3 = inlined_call_operand.vmem [shape: f32[32,512], index: 3, kind: input, shape index: {}]
  %s4 = inlined_call_operand.vmem [shape: f32[2,512], index: 4, kind: output, shape index: {}]
  %s5 = sld [smem:[#allocation0]]
  $region26: #{se_layer.1} parent=0
    _
  %s7 = ssub.s32 1, %s5
  %s8 = scalar_select 0, %s7, %s5
  // Predicated region
  $region2: #{se_layer.1} parent=0 // pred_check
    _
  $region3: #{se_layer.1} parent=0 // pred_check_branch
    %10 = sbr.rel (0) target = $region5
  $region4: #{se_layer.1} parent=0 // pred_region
    _
  $region5: #{se_layer.1} parent=0 // pred_fallthru
    _
  // Predicated region
  $region6: #{se_layer.1} parent=0 // pred_check
    _
  $region7: #{se_layer.1} parent=0 // pred_check_branch
    %12 = sbr.rel (0) target = $region9
  $region8: #{se_layer.1} parent=0 // pred_region
    _
  $region9: #{se_layer.1} parent=0 // pred_fallthru
    _
  // Predicated region
  $region10: #{se_layer.1} parent=0 // pred_check
    _
  $region11: #{se_layer.1} parent=0 // pred_check_branch
    %14 = sbr.rel (0) target = $region13
  $region12: #{se_layer.1} parent=0 // pred_region
    _
  $region13: #{se_layer.1} parent=0 // pred_fallthru
    _
  // Predicated region
  $region14: #{se_layer.1} parent=0 // pred_check
    _
  $region15: #{se_layer.1} parent=0 // pred_check_branch
    %16 = sbr.rel (0) target = $region17
  $region16: #{se_layer.1} parent=0 // pred_region
    _
  $region17: #{se_layer.1} parent=0 // pred_fallthru
    _
  %v17 = vld [vmem:[%s0] sm:$0xff]
  %v18 = vld [vmem:[%s1] sm:$0xff]
  %v19 = vld [vmem:[%s1 + $0x8] sm:$0xff]
  %v20 = vld [vmem:[%s1 + $0x10] sm:$0xff]
  %v21 = vld [vmem:[%s1 + $0x18] sm:$0xff]
  %v22 = vld [vmem:[%s1 + $0x20] sm:$0xff]
  %v23 = vld [vmem:[%s1 + $0x28] sm:$0xff]
  %v24 = vld [vmem:[%s1 + $0x30] sm:$0xff]
  %v25 = vld [vmem:[%s1 + $0x38] sm:$0xff]
  %v26 = vld [vmem:[%s1 + $0x40] sm:$0xff]
  %v27 = vld [vmem:[%s1 + $0x48] sm:$0xff]
  %v28 = vld [vmem:[%s1 + $0x50] sm:$0xff]
  %v29 = vld [vmem:[%s1 + $0x58] sm:$0xff]
  %v30 = vld [vmem:[%s1 + $0x60] sm:$0xff]
  %v31 = vld [vmem:[%s1 + $0x68] sm:$0xff]
  %v32 = vld [vmem:[%s1 + $0x70] sm:$0xff]
  %v33 = vld [vmem:[%s1 + $0x78] sm:$0xff]
  %v34 = vld [vmem:[%s1 + $0x80] sm:$0xff]
  %v35 = vld [vmem:[%s1 + $0x88] sm:$0xff]
  %v36 = vld [vmem:[%s1 + $0x90] sm:$0xff]
  %v37 = vld [vmem:[%s1 + $0x98] sm:$0xff]
  %v38 = vld [vmem:[%s1 + $0xa0] sm:$0xff]
  %v39 = vld [vmem:[%s1 + $0xa8] sm:$0xff]
  %v40 = vld [vmem:[%s1 + $0xb0] sm:$0xff]
  %v41 = vld [vmem:[%s1 + $0xb8] sm:$0xff]
  %v42 = vld [vmem:[%s1 + $0xc0] sm:$0xff]
  %v43 = vld [vmem:[%s1 + $0xc8] sm:$0xff]
  %v44 = vld [vmem:[%s1 + $0xd0] sm:$0xff]
  %v45 = vld [vmem:[%s1 + $0xd8] sm:$0xff]
  %v46 = vld [vmem:[%s1 + $0xe0] sm:$0xff]
  %v47 = vld [vmem:[%s1 + $0xe8] sm:$0xff]
  %v48 = vld [vmem:[%s1 + $0xf0] sm:$0xff]
  %v49 = vld [vmem:[%s1 + $0xf8] sm:$0xff]
  %v50 = vld [vmem:[%s1 + $0x100] sm:$0xff]
  %v51 = vld [vmem:[%s1 + $0x108] sm:$0xff]
  %v52 = vld [vmem:[%s1 + $0x110] sm:$0xff]
  %v53 = vld [vmem:[%s1 + $0x118] sm:$0xff]
  %v54 = vld [vmem:[%s1 + $0x120] sm:$0xff]
  %v55 = vld [vmem:[%s1 + $0x128] sm:$0xff]
  %v56 = vld [vmem:[%s1 + $0x130] sm:$0xff]
  %v57 = vld [vmem:[%s1 + $0x138] sm:$0xff]
  %v58 = vld [vmem:[%s1 + $0x140] sm:$0xff]
  %v59 = vld [vmem:[%s1 + $0x148] sm:$0xff]
  %v60 = vld [vmem:[%s1 + $0x150] sm:$0xff]
  %v61 = vld [vmem:[%s1 + $0x158] sm:$0xff]
  %v62 = vld [vmem:[%s1 + $0x160] sm:$0xff]
  %v63 = vld [vmem:[%s1 + $0x168] sm:$0xff]
  %v64 = vld [vmem:[%s1 + $0x170] sm:$0xff]
  %v65 = vld [vmem:[%s1 + $0x178] sm:$0xff]
  %v66 = vld [vmem:[%s1 + $0x180] sm:$0xff]
  %v67 = vld [vmem:[%s1 + $0x188] sm:$0xff]
  %v68 = vld [vmem:[%s1 + $0x190] sm:$0xff]
  %v69 = vld [vmem:[%s1 + $0x198] sm:$0xff]
  %v70 = vld [vmem:[%s1 + $0x1a0] sm:$0xff]
  %v71 = vld [vmem:[%s1 + $0x1a8] sm:$0xff]
  %v72 = vld [vmem:[%s1 + $0x1b0] sm:$0xff]
  %v73 = vld [vmem:[%s1 + $0x1b8] sm:$0xff]
  %v74 = vld [vmem:[%s1 + $0x1c0] sm:$0xff]
  %v75 = vld [vmem:[%s1 + $0x1c8] sm:$0xff]
  %v76 = vld [vmem:[%s1 + $0x1d0] sm:$0xff]
  %v77 = vld [vmem:[%s1 + $0x1d8] sm:$0xff]
  %v78 = vld [vmem:[%s1 + $0x1e0] sm:$0xff]
  %v79 = vld [vmem:[%s1 + $0x1e8] sm:$0xff]
  %v80 = vld [vmem:[%s1 + $0x1f0] sm:$0xff]
  %v81 = vld [vmem:[%s1 + $0x1f8] sm:$0xff]
  %v83 = vcombine.high %v17, %v17
  %v85 = vunpack.c.l.s4 1983009808
  %v86 = vunpack.c.0.s8 %v85
  %v87 = vlaneseq
  %v88 = vshrl.u32 %v87, 7
  %v89 = vsub.s32 %v86, %v88
  %v90 = vrot.slane %v17, %v89
  %v92 = vunpack.c.l.s4 1983009808
  %v93 = vunpack.c.0.s8 %v92
  %v94 = vlaneseq
  %v95 = vshrl.u32 %v94, 7
  %v96 = vsub.s32 %v93, %v95
  %v97 = vrot.slane %v83, %v96
  %v98 = vcombine.high %v90, %v90
  %v99 = vcombine.high %v97, %v97
  %104 = vmatprep.subr.mxu0 0.0
  %105 = vmatpush1.msra.mxu0 %v18
  %106 = vmatprep.subr.mxu0 0.0
  %107 = vmatpush1.msra.mxu0 %v19
  %108 = vmatprep.subr.mxu0 0.0
  %109 = vmatpush1.msra.mxu0 %v20
  %110 = vmatprep.subr.mxu0 0.0
  %111 = vmatpush1.msra.mxu0 %v21
  %112 = vmatprep.subr.mxu0 0.0
  %113 = vmatpush1.msra.mxu0 %v22
  %114 = vmatprep.subr.mxu0 0.0
  %115 = vmatpush1.msra.mxu0 %v23
  %116 = vmatprep.subr.mxu0 0.0
  %117 = vmatpush1.msra.mxu0 %v24
  %118 = vmatprep.subr.mxu0 0.0
  %119 = vmatpush1.msra.mxu0 %v25
  %120 = vmatprep.subr.mxu0 0.0
  %121 = vmatpush1.msra.mxu0 %v26
  %122 = vmatprep.subr.mxu0 0.0
  %123 = vmatpush1.msra.mxu0 %v27
  %124 = vmatprep.subr.mxu0 0.0
  %125 = vmatpush1.msra.mxu0 %v28
  %126 = vmatprep.subr.mxu0 0.0
  %127 = vmatpush1.msra.mxu0 %v29
  %128 = vmatprep.subr.mxu0 0.0
  %129 = vmatpush1.msra.mxu0 %v30
  %130 = vmatprep.subr.mxu0 0.0
  %131 = vmatpush1.msra.mxu0 %v31
  %132 = vmatprep.subr.mxu0 0.0
  %133 = vmatpush1.msra.mxu0 %v32
  %134 = vmatprep.subr.mxu0 0.0
  %135 = vmatpush1.msra.mxu0 %v33
  %136 = vmatprep.subr.mxu0 0.0
  %137 = vmatpush1.msra.mxu0 %v34
  %138 = vmatprep.subr.mxu0 0.0
  %139 = vmatpush1.msra.mxu0 %v35
  %140 = vmatprep.subr.mxu0 0.0
  %141 = vmatpush1.msra.mxu0 %v36
  %142 = vmatprep.subr.mxu0 0.0
  %143 = vmatpush1.msra.mxu0 %v37
  %144 = vmatprep.subr.mxu0 0.0
  %145 = vmatpush1.msra.mxu0 %v38
  %146 = vmatprep.subr.mxu0 0.0
  %147 = vmatpush1.msra.mxu0 %v39
  %148 = vmatprep.subr.mxu0 0.0
  %149 = vmatpush1.msra.mxu0 %v40
  %150 = vmatprep.subr.mxu0 0.0
  %151 = vmatpush1.msra.mxu0 %v41
  %152 = vmatprep.subr.mxu0 0.0
  %153 = vmatpush1.msra.mxu0 %v42
  %154 = vmatprep.subr.mxu0 0.0
  %155 = vmatpush1.msra.mxu0 %v43
  %156 = vmatprep.subr.mxu0 0.0
  %157 = vmatpush1.msra.mxu0 %v44
  %158 = vmatprep.subr.mxu0 0.0
  %159 = vmatpush1.msra.mxu0 %v45
  %160 = vmatprep.subr.mxu0 0.0
  %161 = vmatpush1.msra.mxu0 %v46
  %162 = vmatprep.subr.mxu0 0.0
  %163 = vmatpush1.msra.mxu0 %v47
  %164 = vmatprep.subr.mxu0 0.0
  %165 = vmatpush1.msra.mxu0 %v48
  %166 = vmatprep.subr.mxu0 0.0
  %167 = vmatpush1.msra.mxu0 %v49
  %168 = vmatprep.mubr.f32.mxu0 %v98
  %169 = vmatmul.mubr.f32.gmra.mrb[0].mxu0 %v90
  %v170 = vpop.f32.mrb[0].mxu0
  %v171 = vadd.f32 0.0, %v170
  %v172 = vpop.f32.mrb[0].mxu0
  %173 = vdwg.mxu0
  %174 = vmatprep.subr.mxu0 0.0
  %175 = vmatpush1.msra.mxu0 %v50
  %176 = vmatprep.subr.mxu0 0.0
  %177 = vmatpush1.msra.mxu0 %v51
  %178 = vmatprep.subr.mxu0 0.0
  %179 = vmatpush1.msra.mxu0 %v52
  %180 = vmatprep.subr.mxu0 0.0
  %181 = vmatpush1.msra.mxu0 %v53
  %182 = vmatprep.subr.mxu0 0.0
  %183 = vmatpush1.msra.mxu0 %v54
  %184 = vmatprep.subr.mxu0 0.0
  %185 = vmatpush1.msra.mxu0 %v55
  %186 = vmatprep.subr.mxu0 0.0
  %187 = vmatpush1.msra.mxu0 %v56
  %188 = vmatprep.subr.mxu0 0.0
  %189 = vmatpush1.msra.mxu0 %v57
  %190 = vmatprep.subr.mxu0 0.0
  %191 = vmatpush1.msra.mxu0 %v58
  %192 = vmatprep.subr.mxu0 0.0
  %193 = vmatpush1.msra.mxu0 %v59
  %194 = vmatprep.subr.mxu0 0.0
  %195 = vmatpush1.msra.mxu0 %v60
  %196 = vmatprep.subr.mxu0 0.0
  %197 = vmatpush1.msra.mxu0 %v61
  %198 = vmatprep.subr.mxu0 0.0
  %199 = vmatpush1.msra.mxu0 %v62
  %200 = vmatprep.subr.mxu0 0.0
  %201 = vmatpush1.msra.mxu0 %v63
  %202 = vmatprep.subr.mxu0 0.0
  %203 = vmatpush1.msra.mxu0 %v64
  %204 = vmatprep.subr.mxu0 0.0
  %205 = vmatpush1.msra.mxu0 %v65
  %206 = vmatprep.subr.mxu0 0.0
  %207 = vmatpush1.msra.mxu0 %v66
  %208 = vmatprep.subr.mxu0 0.0
  %209 = vmatpush1.msra.mxu0 %v67
  %210 = vmatprep.subr.mxu0 0.0
  %211 = vmatpush1.msra.mxu0 %v68
  %212 = vmatprep.subr.mxu0 0.0
  %213 = vmatpush1.msra.mxu0 %v69
  %214 = vmatprep.subr.mxu0 0.0
  %215 = vmatpush1.msra.mxu0 %v70
  %216 = vmatprep.subr.mxu0 0.0
  %217 = vmatpush1.msra.mxu0 %v71
  %218 = vmatprep.subr.mxu0 0.0
  %219 = vmatpush1.msra.mxu0 %v72
  %220 = vmatprep.subr.mxu0 0.0
  %221 = vmatpush1.msra.mxu0 %v73
  %222 = vmatprep.subr.mxu0 0.0
  %223 = vmatpush1.msra.mxu0 %v74
  %224 = vmatprep.subr.mxu0 0.0
  %225 = vmatpush1.msra.mxu0 %v75
  %226 = vmatprep.subr.mxu0 0.0
  %227 = vmatpush1.msra.mxu0 %v76
  %228 = vmatprep.subr.mxu0 0.0
  %229 = vmatpush1.msra.mxu0 %v77
  %230 = vmatprep.subr.mxu0 0.0
  %231 = vmatpush1.msra.mxu0 %v78
  %232 = vmatprep.subr.mxu0 0.0
  %233 = vmatpush1.msra.mxu0 %v79
  %234 = vmatprep.subr.mxu0 0.0
  %235 = vmatpush1.msra.mxu0 %v80
  %236 = vmatprep.subr.mxu0 0.0
  %237 = vmatpush1.msra.mxu0 %v81
  %238 = vmatprep.mubr.f32.mxu0 %v99
  %239 = vmatmul.mubr.f32.gmra.mrb[0].mxu0 %v97
  %v240 = vpop.f32.mrb[0].mxu0
  %v241 = vadd.f32 %v171, %v240
  %v242 = vpop.f32.mrb[0].mxu0
  %243 = vdwg.mxu0
  %v244 = vmax.f32 %v241, 0.0
  %v245 = vld [vmem:[%s2] sm:$0xf]
  %vm246 = vcmask 31744
  %v248 = vsel %vm246, %v244, 0
  %vm250 = vcmask 1043456
  %v252 = vsel %vm250, %v245, 0
  %254 = vmatprep.subr.mxu0 0.0
  %255 = vmatpush1.msra.mxu0 %v252
  %256 = vmatprep.subr.mxu0 0.0
  %257 = vmatpush1.msra.mxu0 0.0
  %258 = vmatprep.subr.mxu0 0.0
  %259 = vmatpush1.msra.mxu0 0.0
  %260 = vmatprep.subr.mxu0 0.0
  %261 = vmatpush1.msra.mxu0 0.0
  %262 = vmatprep.subr.mxu0 0.0
  %263 = vmatpush1.msra.mxu0 0.0
  %264 = vmatprep.subr.mxu0 0.0
  %265 = vmatpush1.msra.mxu0 0.0
  %266 = vmatprep.subr.mxu0 0.0
  %267 = vmatpush1.msra.mxu0 0.0
  %268 = vmatprep.subr.mxu0 0.0
  %269 = vmatpush1.msra.mxu0 0.0
  %270 = vmatprep.subr.mxu0 0.0
  %271 = vmatpush1.msra.mxu0 0.0
  %272 = vmatprep.subr.mxu0 0.0
  %273 = vmatpush1.msra.mxu0 0.0
  %274 = vmatprep.subr.mxu0 0.0
  %275 = vmatpush1.msra.mxu0 0.0
  %276 = vmatprep.subr.mxu0 0.0
  %277 = vmatpush1.msra.mxu0 0.0
  %278 = vmatprep.subr.mxu0 0.0
  %279 = vmatpush1.msra.mxu0 0.0
  %280 = vmatprep.subr.mxu0 0.0
  %281 = vmatpush1.msra.mxu0 0.0
  %282 = vmatprep.subr.mxu0 0.0
  %283 = vmatpush1.msra.mxu0 0.0
  %284 = vmatprep.subr.mxu0 0.0
  %285 = vmatpush1.msra.mxu0 0.0
  %286 = vmatprep.subr.mxu0 0.0
  %287 = vmatpush1.msra.mxu0 0.0
  %288 = vmatprep.subr.mxu0 0.0
  %289 = vmatpush1.msra.mxu0 0.0
  %290 = vmatprep.subr.mxu0 0.0
  %291 = vmatpush1.msra.mxu0 0.0
  %292 = vmatprep.subr.mxu0 0.0
  %293 = vmatpush1.msra.mxu0 0.0
  %294 = vmatprep.subr.mxu0 0.0
  %295 = vmatpush1.msra.mxu0 0.0
  %296 = vmatprep.subr.mxu0 0.0
  %297 = vmatpush1.msra.mxu0 0.0
  %298 = vmatprep.subr.mxu0 0.0
  %299 = vmatpush1.msra.mxu0 0.0
  %300 = vmatprep.subr.mxu0 0.0
  %301 = vmatpush1.msra.mxu0 0.0
  %302 = vmatprep.subr.mxu0 0.0
  %303 = vmatpush1.msra.mxu0 0.0
  %304 = vmatprep.subr.mxu0 0.0
  %305 = vmatpush1.msra.mxu0 0.0
  %306 = vmatprep.subr.mxu0 0.0
  %307 = vmatpush1.msra.mxu0 0.0
  %308 = vmatprep.subr.mxu0 0.0
  %309 = vmatpush1.msra.mxu0 0.0
  %310 = vmatprep.subr.mxu0 0.0
  %311 = vmatpush1.msra.mxu0 0.0
  %312 = vmatprep.subr.mxu0 0.0
  %313 = vmatpush1.msra.mxu0 0.0
  %314 = vmatprep.subr.mxu0 0.0
  %315 = vmatpush1.msra.mxu0 0.0
  %316 = vmatprep.subr.mxu0 0.0
  %317 = vmatpush1.msra.mxu0 0.0
  %318 = vmatprep.mubr.f32.mxu0 0.0
  %319 = vmatmul.mubr.f32.gmra.mrb[0].mxu0 %v248
  %v320 = vpop.f32.mrb[0].mxu0
  %v321 = vadd.f32 0.0, %v320
  %v322 = vpop.f32.mrb[0].mxu0
  %323 = vdwg.mxu0
  %v324 = vxor.u32 %v321, 2147483648
  %v325 = vmul.f32 %v324, 1.442695
  %v326 = vpow.pop %v325
  %v327 = vadd.f32 %v326, 1.0
  %v328 = vrcp.pop %v327
  %v329 = vmul.f32 1.0, %v328
  %v330 = vld [vmem:[%s3] sm:$0xff]
  %v331 = vld [vmem:[%s3 + $0x8] sm:$0xff]
  %v332 = vld [vmem:[%s3 + $0x10] sm:$0xff]
  %v333 = vld [vmem:[%s3 + $0x18] sm:$0xff]
  %v334 = vld [vmem:[%s3 + $0x20] sm:$0xff]
  %v335 = vld [vmem:[%s3 + $0x28] sm:$0xff]
  %v336 = vld [vmem:[%s3 + $0x30] sm:$0xff]
  %v337 = vld [vmem:[%s3 + $0x38] sm:$0xff]
  %v338 = vld [vmem:[%s3 + $0x40] sm:$0xff]
  %v339 = vld [vmem:[%s3 + $0x48] sm:$0xff]
  %v340 = vld [vmem:[%s3 + $0x50] sm:$0xff]
  %v341 = vld [vmem:[%s3 + $0x58] sm:$0xff]
  %v342 = vld [vmem:[%s3 + $0x60] sm:$0xff]
  %v343 = vld [vmem:[%s3 + $0x68] sm:$0xff]
  %v344 = vld [vmem:[%s3 + $0x70] sm:$0xff]
  %v345 = vld [vmem:[%s3 + $0x78] sm:$0xff]
  %vm346 = vcmask 261120
  %v348 = vsel %vm346, %v329, 0
  %350 = vmatprep.subr.mxu0 %v331
  %351 = vmatpush1.msra.mxu0 %v330
  %352 = vmatprep.subr.mxu0 %v335
  %353 = vmatpush1.msra.mxu0 %v334
  %354 = vmatprep.subr.mxu0 %v339
  %355 = vmatpush1.msra.mxu0 %v338
  %356 = vmatprep.subr.mxu0 %v343
  %357 = vmatpush1.msra.mxu0 %v342
  %358 = vmatprep.subr.mxu0 0.0
  %359 = vmatpush1.msra.mxu0 0.0
  %360 = vmatprep.subr.mxu0 0.0
  %361 = vmatpush1.msra.mxu0 0.0
  %362 = vmatprep.subr.mxu0 0.0
  %363 = vmatpush1.msra.mxu0 0.0
  %364 = vmatprep.subr.mxu0 0.0
  %365 = vmatpush1.msra.mxu0 0.0
  %366 = vmatprep.subr.mxu0 0.0
  %367 = vmatpush1.msra.mxu0 0.0
  %368 = vmatprep.subr.mxu0 0.0
  %369 = vmatpush1.msra.mxu0 0.0
  %370 = vmatprep.subr.mxu0 0.0
  %371 = vmatpush1.msra.mxu0 0.0
  %372 = vmatprep.subr.mxu0 0.0
  %373 = vmatpush1.msra.mxu0 0.0
  %374 = vmatprep.subr.mxu0 0.0
  %375 = vmatpush1.msra.mxu0 0.0
  %376 = vmatprep.subr.mxu0 0.0
  %377 = vmatpush1.msra.mxu0 0.0
  %378 = vmatprep.subr.mxu0 0.0
  %379 = vmatpush1.msra.mxu0 0.0
  %380 = vmatprep.subr.mxu0 0.0
  %381 = vmatpush1.msra.mxu0 0.0
  %382 = vmatprep.subr.mxu0 0.0
  %383 = vmatpush1.msra.mxu0 0.0
  %384 = vmatprep.subr.mxu0 0.0
  %385 = vmatpush1.msra.mxu0 0.0
  %386 = vmatprep.subr.mxu0 0.0
  %387 = vmatpush1.msra.mxu0 0.0
  %388 = vmatprep.subr.mxu0 0.0
  %389 = vmatpush1.msra.mxu0 0.0
  %390 = vmatprep.subr.mxu0 0.0
  %391 = vmatpush1.msra.mxu0 0.0
  %392 = vmatprep.subr.mxu0 0.0
  %393 = vmatpush1.msra.mxu0 0.0
  %394 = vmatprep.subr.mxu0 0.0
  %395 = vmatpush1.msra.mxu0 0.0
  %396 = vmatprep.subr.mxu0 0.0
  %397 = vmatpush1.msra.mxu0 0.0
  %398 = vmatprep.subr.mxu0 0.0
  %399 = vmatpush1.msra.mxu0 0.0
  %400 = vmatprep.subr.mxu0 0.0
  %401 = vmatpush1.msra.mxu0 0.0
  %402 = vmatprep.subr.mxu0 0.0
  %403 = vmatpush1.msra.mxu0 0.0
  %404 = vmatprep.subr.mxu0 0.0
  %405 = vmatpush1.msra.mxu0 0.0
  %406 = vmatprep.subr.mxu0 0.0
  %407 = vmatpush1.msra.mxu0 0.0
  %408 = vmatprep.subr.mxu0 0.0
  %409 = vmatpush1.msra.mxu0 0.0
  %410 = vmatprep.subr.mxu0 0.0
  %411 = vmatpush1.msra.mxu0 0.0
  %412 = vmatprep.subr.mxu0 0.0
  %413 = vmatpush1.msra.mxu0 0.0
  %414 = vmatprep.mubr.f32.mxu0 0.0
  %415 = vmatmul.mubr.f32.gmra.mrb[0].mxu0 %v348
  %v416 = vpop.f32.mrb[0].mxu0
  %v417 = vadd.f32 0.0, %v416
  %v418 = vpop.f32.mrb[0].mxu0
  %v419 = vadd.f32 0.0, %v418
  %420 = vdwg.mxu0
  %421 = vmatprep.subr.mxu0 %v333
  %422 = vmatpush1.msra.mxu0 %v332
  %423 = vmatprep.subr.mxu0 %v337
  %424 = vmatpush1.msra.mxu0 %v336
  %425 = vmatprep.subr.mxu0 %v341
  %426 = vmatpush1.msra.mxu0 %v340
  %427 = vmatprep.subr.mxu0 %v345
  %428 = vmatpush1.msra.mxu0 %v344
  %429 = vmatprep.subr.mxu0 0.0
  %430 = vmatpush1.msra.mxu0 0.0
  %431 = vmatprep.subr.mxu0 0.0
  %432 = vmatpush1.msra.mxu0 0.0
  %433 = vmatprep.subr.mxu0 0.0
  %434 = vmatpush1.msra.mxu0 0.0
  %435 = vmatprep.subr.mxu0 0.0
  %436 = vmatpush1.msra.mxu0 0.0
  %437 = vmatprep.subr.mxu0 0.0
  %438 = vmatpush1.msra.mxu0 0.0
  %439 = vmatprep.subr.mxu0 0.0
  %440 = vmatpush1.msra.mxu0 0.0
  %441 = vmatprep.subr.mxu0 0.0
  %442 = vmatpush1.msra.mxu0 0.0
  %443 = vmatprep.subr.mxu0 0.0
  %444 = vmatpush1.msra.mxu0 0.0
  %445 = vmatprep.subr.mxu0 0.0
  %446 = vmatpush1.msra.mxu0 0.0
  %447 = vmatprep.subr.mxu0 0.0
  %448 = vmatpush1.msra.mxu0 0.0
  %449 = vmatprep.subr.mxu0 0.0
  %450 = vmatpush1.msra.mxu0 0.0
  %451 = vmatprep.subr.mxu0 0.0
  %452 = vmatpush1.msra.mxu0 0.0
  %453 = vmatprep.subr.mxu0 0.0
  %454 = vmatpush1.msra.mxu0 0.0
  %455 = vmatprep.subr.mxu0 0.0
  %456 = vmatpush1.msra.mxu0 0.0
  %457 = vmatprep.subr.mxu0 0.0
  %458 = vmatpush1.msra.mxu0 0.0
  %459 = vmatprep.subr.mxu0 0.0
  %460 = vmatpush1.msra.mxu0 0.0
  %461 = vmatprep.subr.mxu0 0.0
  %462 = vmatpush1.msra.mxu0 0.0
  %463 = vmatprep.subr.mxu0 0.0
  %464 = vmatpush1.msra.mxu0 0.0
  %465 = vmatprep.subr.mxu0 0.0
  %466 = vmatpush1.msra.mxu0 0.0
  %467 = vmatprep.subr.mxu0 0.0
  %468 = vmatpush1.msra.mxu0 0.0
  %469 = vmatprep.subr.mxu0 0.0
  %470 = vmatpush1.msra.mxu0 0.0
  %471 = vmatprep.subr.mxu0 0.0
  %472 = vmatpush1.msra.mxu0 0.0
  %473 = vmatprep.subr.mxu0 0.0
  %474 = vmatpush1.msra.mxu0 0.0
  %475 = vmatprep.subr.mxu0 0.0
  %476 = vmatpush1.msra.mxu0 0.0
  %477 = vmatprep.subr.mxu0 0.0
  %478 = vmatpush1.msra.mxu0 0.0
  %479 = vmatprep.subr.mxu0 0.0
  %480 = vmatpush1.msra.mxu0 0.0
  %481 = vmatprep.subr.mxu0 0.0
  %482 = vmatpush1.msra.mxu0 0.0
  %483 = vmatprep.subr.mxu0 0.0
  %484 = vmatpush1.msra.mxu0 0.0
  %485 = vmatprep.mubr.f32.mxu0 0.0
  %486 = vmatmul.mubr.f32.gmra.mrb[0].mxu0 %v348
  %v487 = vpop.f32.mrb[0].mxu0
  %v488 = vadd.f32 0.0, %v487
  %v489 = vpop.f32.mrb[0].mxu0
  %v490 = vadd.f32 0.0, %v489
  %491 = vdwg.mxu0
  %v496 = vcombine.low %v417, %v419
  %v497 = vcombine.low %v488, %v490
  %v499 = vunpack.c.l.s4 1983009808
  %v500 = vunpack.c.0.s8 %v499
  %v501 = vlaneseq
  %v502 = vshrl.u32 %v501, 7
  %v503 = vsub.s32 %v500, %v502
  %v504 = vrot.slane %v496, %v503
  %v506 = vunpack.c.l.s4 1983009808
  %v507 = vunpack.c.0.s8 %v506
  %v508 = vlaneseq
  %v509 = vshrl.u32 %v508, 7
  %v510 = vsub.s32 %v507, %v509
  %v511 = vrot.slane %v497, %v510
  %v512 = vcombine.low %v504, %v511
  %v514 = vmul.f32 %v17, %v512
  %515 = vst [vmem:[%s4] sm:$0xff] %v514
  // Predicated region
  $region18: #{se_layer.1} parent=0 // pred_check
    _
  $region19: #{se_layer.1} parent=0 // pred_check_branch
    %517 = sbr.rel (0) target = $region21
  $region20: #{se_layer.1} parent=0 // pred_region
    _
  $region21: #{se_layer.1} parent=0 // pred_fallthru
    _
  // Predicated region
  $region22: #{se_layer.1} parent=0 // pred_check
    _
  $region23: #{se_layer.1} parent=0 // pred_check_branch
    %519 = sbr.rel (0) target = $region25
  $region24: #{se_layer.1} parent=0 // pred_region
    _
  $region25: #{se_layer.1} parent=0 // pred_fallthru
    _

</llo_original>
